<compile_context>
chip_gen: v6e
topology: v6e:2x2x1
jax: 0.10.0
libtpu: 0.0.40
codegen_flags: <defaults>
</compile_context>

<pallas_src>
import functools
import math

import jax
import jax.numpy as jnp
import numpy as np
from jax.experimental import pallas as pl
from jax.experimental.pallas import tpu as pltpu

# ----------------------------- hyper-parameters ------------------------------
IN_FEATURES = 16
OUT_FEATURES = 32
GRID_SIZE = 8          # (PyTorch default is 500; small grid chosen for the demo)
SPLINE_ORDER = 3
GRID_RANGE = (-1.0, 1.0)

GK = GRID_SIZE + SPLINE_ORDER            # 11 B-spline bases per input feature
GT = GRID_SIZE + 2 * SPLINE_ORDER + 1    # 15 knots per input feature
LP = 16                                  # padded per-feature slot count (> GT-1, margin needed)
KFLAT = IN_FEATURES * LP                 # 256 = lane-flattened (feature, slot) axis
NT = 2 + SPLINE_ORDER                    # rows in the precomputed knot table

TB_CAP = 2048                            # max batch-tile rows (multiple of 8)
VMEM_LIMIT_BYTES = 48 * 1024 * 1024      # > v5e 16MiB / v6e-v7x 32MiB scoped defaults,
                                         # < v7x 64MiB physical


# --------------------------------- kernel ------------------------------------
def _kan_linear_kernel(x_ref, tabs_ref, rep_ref, bw_ref, sw_ref, o_ref, *,
                       spline_order):
    """Fused KANLinear forward for one batch tile.

    x_ref:    (TB, IN)       input rows (f32)
    tabs_ref: (NT, KFLAT)    [t_j ; t_{j+1} ; 1/(t_{j+k}-t_j) for k=1..order], zero-padded
    rep_ref:  (IN, KFLAT)    0/1 replication matrix (feature -> its 16 lane slots)
    bw_ref:   (IN, OUT)      base weight, transposed
    sw_ref:   (KFLAT, OUT)   scaled spline weight, flattened + zero padded
    o_ref:    (TB, OUT)      output
    """
    x = x_ref[...]                                            # (TB, IN), f32

    # ---- base path: SiLU(x) @ W_base^T (sigmoid -> EUP, matmul -> MXU) ----
    silu = x * jax.nn.sigmoid(x)
    acc = jnp.dot(silu, bw_ref[...], preferred_element_type=jnp.float32)

    # ---- replicate x onto the lane-flattened (feature, slot) axis (small MXU op) ----
    x_rep = jnp.dot(x, rep_ref[...], preferred_element_type=jnp.float32)   # (TB, KFLAT)

    # ---- spline path: Cox-de Boor recursion, lane-dense (TB, KFLAT), f32 ----
    tabs = tabs_ref[...]                                      # (NT, KFLAT)
    g0 = tabs[0:1]                                            # t[j]   (pad lanes = 0)
    g1 = tabs[1:2]                                            # t[j+1] (pad lanes = 0)
    dx0 = x_rep - g0                                          # hoisted: invariant in k
    bases = jnp.logical_and(x_rep >= g0, x_rep < g1).astype(jnp.float32)
    for k in range(1, spline_order + 1):                      # static unroll
        invl = tabs[k + 1:k + 2]                              # 1/(t[j+k]-t[j]), extended, pad = 0
        p = (dx0 * invl) * bases                              # left_j * bases[j]
        # right_j = 1 - left_{j+1}  =>  bases_new[j] = P[j] + bases[j+1] - P[j+1]
        # roll is linear, so one XLU rotate per level; wrap/pad lanes stay finite
        # and never reach the GK valid lanes (LP - (GT-1) = 2 slots of margin).
        bases = p + pltpu.roll(bases - p, KFLAT - 1, 1)
    # bases: (TB, KFLAT); valid lanes = GK bases per feature, pad lanes killed by
    # the zero-padded sw_ref columns below.

    # ---- single MXU contraction over (feature, basis) ----
    acc = acc + jnp.dot(bases, sw_ref[...], preferred_element_type=jnp.float32)
    o_ref[...] = acc


# ---------------------------- parameter preparation ---------------------------
def prepare_kan_params(grid_buf, base_weight, spline_weight, spline_scaler):
    """One-time parameter glue (hoisted out of the hot path)."""
    g = grid_buf.astype(jnp.float32)                          # (IN, GT)

    def pad_lp(a):                                            # (IN, w) -> (IN, LP), zero pad
        return jnp.pad(a, ((0, 0), (0, LP - a.shape[1])))

    rows = [pad_lp(g[:, :-1]),                                # t[j]
            pad_lp(g[:, 1:])]                                 # t[j+1]
    for k in range(1, SPLINE_ORDER + 1):
        # extended left reciprocal: 1/(t[j+k]-t[j]) for j = 0..GT-1-k  (pad = 0)
        rows.append(pad_lp(1.0 / (g[:, k:] - g[:, :-k])))
    tabs = jnp.stack([r.reshape(-1) for r in rows], axis=0)   # (NT, KFLAT), feature-major

    rep_np = np.zeros((IN_FEATURES, KFLAT), np.float32)       # x -> per-feature lane slots
    for i in range(IN_FEATURES):
        rep_np[i, i * LP:(i + 1) * LP] = 1.0
    rep = jnp.asarray(rep_np)

    bw_t = base_weight.astype(jnp.float32).T                  # (IN, OUT)
    scaled = spline_weight * spline_scaler[..., None]         # (OUT, IN, GK)
    sw = jnp.transpose(scaled, (1, 2, 0)).astype(jnp.float32) # (IN, GK, OUT)
    sw = jnp.pad(sw, ((0, 0), (0, LP - GK), (0, 0)))          # zero-pad basis slots -> (IN, LP, OUT)
    sw_flat = sw.reshape(KFLAT, OUT_FEATURES)                 # (KFLAT, OUT)
    return tabs, rep, bw_t, sw_flat


# -------------------------------- wrapper -------------------------------------
def _round_up(a, m):
    return ((a + m - 1) // m) * m


def _cdiv(a, b):
    return (a + b - 1) // b


def _choose_tiling(B):
    """Pick (TB, B_pad): TB multiple of 8, TB <= TB_CAP, and an even tile count
    (>= 2 grid steps) whenever the batch allows it so both v7x TCs get work."""
    B8 = _round_up(max(B, 1), 8)
    if B8 <= 8:
        return B8, B8
    n_tiles = max(2, _cdiv(B8, TB_CAP))
    if n_tiles % 2:
        n_tiles += 1
    TB = _round_up(_cdiv(B8, n_tiles), 8)
    return TB, TB * n_tiles


@jax.jit
def kan_linear(x, tabs, rep, bw_t, sw_flat):
    """Forward pass identical to KANLinear.forward."""
    orig_shape = x.shape
    assert orig_shape[-1] == IN_FEATURES
    x2d = x.reshape(-1, IN_FEATURES).astype(jnp.float32)
    B = x2d.shape[0]

    TB, B_pad = _choose_tiling(B)
    if B_pad != B:
        x2d = jnp.pad(x2d, ((0, B_pad - B), (0, 0)))          # padded rows sliced off below

    kernel = functools.partial(_kan_linear_kernel, spline_order=SPLINE_ORDER)
    out = pl.pallas_call(
        kernel,
        out_shape=jax.ShapeDtypeStruct((B_pad, OUT_FEATURES), jnp.float32),
        grid=(B_pad // TB,),
        in_specs=[
            pl.BlockSpec((TB, IN_FEATURES), lambda i: (i, 0)),        # streamed per tile
            pl.BlockSpec((NT, KFLAT), lambda i: (0, 0)),              # resident
            pl.BlockSpec((IN_FEATURES, KFLAT), lambda i: (0, 0)),     # resident
            pl.BlockSpec((IN_FEATURES, OUT_FEATURES), lambda i: (0, 0)),
            pl.BlockSpec((KFLAT, OUT_FEATURES), lambda i: (0, 0)),
        ],
        out_specs=pl.BlockSpec((TB, OUT_FEATURES), lambda i: (i, 0)),
        compiler_params=pltpu.CompilerParams(
            dimension_semantics=("parallel",),
            vmem_limit_bytes=VMEM_LIMIT_BYTES),
    )(x2d, tabs, rep, bw_t, sw_flat)

    out = out[:B]
    return out.reshape(*orig_shape[:-1], OUT_FEATURES)


# ----------------------------- pure-JAX reference -----------------------------
def kan_linear_ref(x, grid_buf, base_weight, spline_weight, spline_scaler):
    x2d = x.reshape(-1, IN_FEATURES).astype(jnp.float32)
    silu = x2d * jax.nn.sigmoid(x2d)
    base_out = silu @ base_weight.T

    xe = x2d[:, :, None]
    g = grid_buf[None, :, :]
    bases = ((xe >= g[:, :, :-1]) & (xe < g[:, :, 1:])).astype(jnp.float32)
    for k in range(1, SPLINE_ORDER + 1):
        left = (xe - g[:, :, :-(k + 1)]) / (g[:, :, k:-1] - g[:, :, :-(k + 1)])
        right = (g[:, :, k + 1:] - xe) / (g[:, :, k + 1:] - g[:, :, 1:-k])
        bases = left * bases[:, :, :-1] + right * bases[:, :, 1:]

    scaled = spline_weight * spline_scaler[..., None]                 # (OUT, IN, GK)
    spline_out = bases.reshape(x2d.shape[0], -1) @ scaled.reshape(OUT_FEATURES, -1).T
    out = base_out + spline_out
    return out.reshape(*x.shape[:-1], OUT_FEATURES)


# ---------------------------------- main ---------------------------------------
if __name__ == "__main__":
    key = jax.random.PRNGKey(0)
    k1, k2, k3, k4, k5 = jax.random.split(key, 5)

    # deterministic parameter init (shapes from KANLinear.__init__)
    # TODO(synk): __init__'s curve2coeff init uses torch.linalg.lstsq; replaced
    # with a deterministic random init of the same shape (synthetic weights).
    h = (GRID_RANGE[1] - GRID_RANGE[0]) / GRID_SIZE
    knots = (jnp.arange(-SPLINE_ORDER, GRID_SIZE + SPLINE_ORDER + 1,
                        dtype=jnp.float32) * h + GRID_RANGE[0])
    grid_buf = jnp.broadcast_to(knots, (IN_FEATURES, GT)).astype(jnp.float32)

    bound = 1.0 / math.sqrt(IN_FEATURES)
    base_weight = jax.random.uniform(k1, (OUT_FEATURES, IN_FEATURES),
                                     minval=-bound, maxval=bound, dtype=jnp.float32)
    spline_weight = (jax.random.normal(k2, (OUT_FEATURES, IN_FEATURES, GK),
                                       dtype=jnp.float32) * (0.1 / GRID_SIZE))
    spline_scaler = jax.random.uniform(k3, (OUT_FEATURES, IN_FEATURES),
                                       minval=-bound, maxval=bound, dtype=jnp.float32)

    # one-time weight/table prep (hoisted out of the per-call hot path)
    tabs, rep, bw_t, sw_flat = prepare_kan_params(
        grid_buf, base_weight, spline_weight, spline_scaler)

    # small input: (batch=2, seq=4, in_features=16) -> flattened B = 8 rows
    x = jax.random.normal(k4, (2, 4, IN_FEATURES), dtype=jnp.float32) * 0.5
    out = jax.block_until_ready(kan_linear(x, tabs, rep, bw_t, sw_flat))
    ref = kan_linear_ref(x, grid_buf, base_weight, spline_weight, spline_scaler)
    np.testing.assert_allclose(np.asarray(out), np.asarray(ref), rtol=1e-4, atol=1e-4)
    assert out.shape == (2, 4, OUT_FEATURES)

    # larger input exercising the multi-tile (>= 2 grid steps) + batch-pad path
    x2 = jax.random.normal(k5, (3, 200, IN_FEATURES), dtype=jnp.float32) * 0.7
    out2 = jax.block_until_ready(kan_linear(x2, tabs, rep, bw_t, sw_flat))
    ref2 = kan_linear_ref(x2, grid_buf, base_weight, spline_weight, spline_scaler)
    np.testing.assert_allclose(np.asarray(out2), np.asarray(ref2), rtol=1e-4, atol=1e-4)
    assert out2.shape == (3, 200, OUT_FEATURES)

    print("KERNEL_OK")
</pallas_src>

<mosaic_0001>
module attributes {stable_mosaic.version = 11 : i64} {
  func.func @_kan_linear_kernel(%arg0: i32, %arg1: memref<8x16xf32, #tpu.memory_space<vmem>>, %arg2: memref<5x256xf32, #tpu.memory_space<vmem>>, %arg3: memref<16x256xf32, #tpu.memory_space<vmem>>, %arg4: memref<16x32xf32, #tpu.memory_space<vmem>>, %arg5: memref<256x32xf32, #tpu.memory_space<vmem>>, %arg6: memref<8x32xf32, #tpu.memory_space<vmem>>) attributes {dimension_semantics = [#tpu.dimension_semantics<parallel>], iteration_bounds = array<i64: 1>, scalar_prefetch = 0 : i64, scratch_operands = 0 : i64, tpu.core_type = #tpu.core_type<tc>, window_params = [{transform_indices = @transform_0, window_bounds = array<i64: 8, 16>}, {pipeline_mode = #tpu.pipeline_mode<synchronous>, transform_indices = @transform_1, window_bounds = array<i64: 5, 256>}, {pipeline_mode = #tpu.pipeline_mode<synchronous>, transform_indices = @transform_2, window_bounds = array<i64: 16, 256>}, {pipeline_mode = #tpu.pipeline_mode<synchronous>, transform_indices = @transform_3, window_bounds = array<i64: 16, 32>}, {pipeline_mode = #tpu.pipeline_mode<synchronous>, transform_indices = @transform_4, window_bounds = array<i64: 256, 32>}, {transform_indices = @transform_5, window_bounds = array<i64: 8, 32>}]} {
    %c0 = arith.constant 0 : index
    %c0_0 = arith.constant 0 : index
    %0 = vector.load %arg1[%c0, %c0_0] : memref<8x16xf32, #tpu.memory_space<vmem>>, vector<8x16xf32>
    %1 = arith.negf %0 : vector<8x16xf32>
    %2 = math.exp %1 : vector<8x16xf32>
    %cst = arith.constant 1.000000e+00 : f32
    %3 = vector.broadcast %cst : f32 to vector<8x16xf32>
    %4 = arith.addf %3, %2 : vector<8x16xf32>
    %5 = arith.divf %3, %4 : vector<8x16xf32>
    %6 = arith.mulf %0, %5 : vector<8x16xf32>
    %c0_1 = arith.constant 0 : index
    %c0_2 = arith.constant 0 : index
    %7 = vector.load %arg4[%c0_1, %c0_2] : memref<16x32xf32, #tpu.memory_space<vmem>>, vector<16x32xf32>
    %cst_3 = arith.constant dense<0.000000e+00> : vector<8x32xf32>
    %8 = tpu.matmul %6, %7, %cst_3 {dimension_numbers = #tpu.dot_dimension_numbers<[1], [0], [0], [1], [0, 0, 1, 1], [], []>} : vector<8x16xf32>, vector<16x32xf32>, vector<8x32xf32> -> vector<8x32xf32>
    %c0_4 = arith.constant 0 : index
    %c0_5 = arith.constant 0 : index
    %9 = vector.load %arg3[%c0_4, %c0_5] : memref<16x256xf32, #tpu.memory_space<vmem>>, vector<16x256xf32>
    %cst_6 = arith.constant dense<0.000000e+00> : vector<8x256xf32>
    %10 = tpu.matmul %0, %9, %cst_6 {dimension_numbers = #tpu.dot_dimension_numbers<[1], [0], [0], [1], [0, 0, 1, 1], [], []>} : vector<8x16xf32>, vector<16x256xf32>, vector<8x256xf32> -> vector<8x256xf32>
    %c0_7 = arith.constant 0 : index
    %c0_8 = arith.constant 0 : index
    %11 = vector.load %arg2[%c0_7, %c0_8] : memref<5x256xf32, #tpu.memory_space<vmem>>, vector<5x256xf32>
    %12 = vector.extract_strided_slice %11 {offsets = [0, 0], sizes = [1, 256], strides = [1, 1]} : vector<5x256xf32> to vector<1x256xf32>
    %13 = vector.extract_strided_slice %11 {offsets = [1, 0], sizes = [1, 256], strides = [1, 1]} : vector<5x256xf32> to vector<1x256xf32>
    %14 = vector.broadcast %12 : vector<1x256xf32> to vector<8x256xf32>
    %15 = arith.subf %10, %14 : vector<8x256xf32>
    %16 = vector.broadcast %12 : vector<1x256xf32> to vector<8x256xf32>
    %17 = arith.cmpf oge, %10, %16 : vector<8x256xf32>
    %18 = vector.broadcast %13 : vector<1x256xf32> to vector<8x256xf32>
    %19 = arith.cmpf olt, %10, %18 : vector<8x256xf32>
    %20 = arith.andi %17, %19 : vector<8x256xi1>
    %21 = arith.extui %20 : vector<8x256xi1> to vector<8x256xi32>
    %22 = arith.sitofp %21 : vector<8x256xi32> to vector<8x256xf32>
    %23 = vector.extract_strided_slice %11 {offsets = [2, 0], sizes = [1, 256], strides = [1, 1]} : vector<5x256xf32> to vector<1x256xf32>
    %24 = vector.broadcast %23 : vector<1x256xf32> to vector<8x256xf32>
    %25 = arith.mulf %15, %24 : vector<8x256xf32>
    %26 = arith.mulf %25, %22 : vector<8x256xf32>
    %27 = arith.subf %22, %26 : vector<8x256xf32>
    %c255_i32 = arith.constant 255 : i32
    %28 = tpu.dynamic_rotate %27 by %c255_i32 dim 1 : vector<8x256xf32>, i32 -> vector<8x256xf32>
    %29 = arith.addf %26, %28 : vector<8x256xf32>
    %30 = vector.extract_strided_slice %11 {offsets = [3, 0], sizes = [1, 256], strides = [1, 1]} : vector<5x256xf32> to vector<1x256xf32>
    %31 = vector.broadcast %30 : vector<1x256xf32> to vector<8x256xf32>
    %32 = arith.mulf %15, %31 : vector<8x256xf32>
    %33 = arith.mulf %32, %29 : vector<8x256xf32>
    %34 = arith.subf %29, %33 : vector<8x256xf32>
    %c255_i32_9 = arith.constant 255 : i32
    %35 = tpu.dynamic_rotate %34 by %c255_i32_9 dim 1 : vector<8x256xf32>, i32 -> vector<8x256xf32>
    %36 = arith.addf %33, %35 : vector<8x256xf32>
    %37 = vector.extract_strided_slice %11 {offsets = [4, 0], sizes = [1, 256], strides = [1, 1]} : vector<5x256xf32> to vector<1x256xf32>
    %38 = vector.broadcast %37 : vector<1x256xf32> to vector<8x256xf32>
    %39 = arith.mulf %15, %38 : vector<8x256xf32>
    %40 = arith.mulf %39, %36 : vector<8x256xf32>
    %41 = arith.subf %36, %40 : vector<8x256xf32>
    %c255_i32_10 = arith.constant 255 : i32
    %42 = tpu.dynamic_rotate %41 by %c255_i32_10 dim 1 : vector<8x256xf32>, i32 -> vector<8x256xf32>
    %43 = arith.addf %40, %42 : vector<8x256xf32>
    %c0_11 = arith.constant 0 : index
    %c0_12 = arith.constant 0 : index
    %44 = vector.load %arg5[%c0_11, %c0_12] : memref<256x32xf32, #tpu.memory_space<vmem>>, vector<256x32xf32>
    %cst_13 = arith.constant dense<0.000000e+00> : vector<8x32xf32>
    %45 = tpu.matmul %43, %44, %cst_13 {dimension_numbers = #tpu.dot_dimension_numbers<[1], [0], [0], [1], [0, 0, 1, 1], [], []>} : vector<8x256xf32>, vector<256x32xf32>, vector<8x32xf32> -> vector<8x32xf32>
    %46 = arith.addf %8, %45 : vector<8x32xf32>
    %c0_14 = arith.constant 0 : index
    %c0_15 = arith.constant 0 : index
    %47 = vector.load %arg6[%c0_14, %c0_15] : memref<8x32xf32, #tpu.memory_space<vmem>>, vector<8x32xf32>
    tpu.vector_store %arg6[%c0_14, %c0_15], %46 {strides = array<i32>} : memref<8x32xf32, #tpu.memory_space<vmem>>, vector<8x32xf32>,
    return
  }
  func.func @transform_0(%arg0: i32) -> (i32, i32) {
    %c0_i32 = arith.constant 0 : i32
    %c0_i32_0 = arith.constant 0 : i32
    return %arg0, %c0_i32 : i32, i32
  }
  func.func @transform_1(%arg0: i32) -> (i32, i32) {
    %c0_i32 = arith.constant 0 : i32
    %c0_i32_0 = arith.constant 0 : i32
    %c0_i32_1 = arith.constant 0 : i32
    return %c0_i32, %c0_i32_0 : i32, i32
  }
  func.func @transform_2(%arg0: i32) -> (i32, i32) {
    %c0_i32 = arith.constant 0 : i32
    %c0_i32_0 = arith.constant 0 : i32
    %c0_i32_1 = arith.constant 0 : i32
    return %c0_i32, %c0_i32_0 : i32, i32
  }
  func.func @transform_3(%arg0: i32) -> (i32, i32) {
    %c0_i32 = arith.constant 0 : i32
    %c0_i32_0 = arith.constant 0 : i32
    %c0_i32_1 = arith.constant 0 : i32
    return %c0_i32, %c0_i32_0 : i32, i32
  }
  func.func @transform_4(%arg0: i32) -> (i32, i32) {
    %c0_i32 = arith.constant 0 : i32
    %c0_i32_0 = arith.constant 0 : i32
    %c0_i32_1 = arith.constant 0 : i32
    return %c0_i32, %c0_i32_0 : i32, i32
  }
  func.func @transform_5(%arg0: i32) -> (i32, i32) {
    %c0_i32 = arith.constant 0 : i32
    %c0_i32_0 = arith.constant 0 : i32
    return %arg0, %c0_i32 : i32, i32
  }
}

</mosaic_0001>

<llo_original>
// kernel: kan_linear.1
$region0: #{kan_linear.1}
  #allocation0 [shape = 'u32[]', space=smem, size = 0x4, offset = 0x4, fixed_abs, tag = 'smem constant byte address 0x4 - core index']
  #allocation1 [shape = 'u32[144,128]{1,0:T(1,128)}', space=vmem, size = 0x12000, scoped, tag = 'internal scratch']
  %s0 = inlined_call_operand.vmem [shape: f32[8,16], index: 0, kind: input, shape index: {}]
  %s1 = inlined_call_operand.vmem [shape: f32[5,256], index: 1, kind: input, shape index: {}]
  %s2 = inlined_call_operand.vmem [shape: f32[16,256], index: 2, kind: input, shape index: {}]
  %s3 = inlined_call_operand.vmem [shape: f32[16,32], index: 3, kind: input, shape index: {}]
  %s4 = inlined_call_operand.vmem [shape: f32[256,32], index: 4, kind: input, shape index: {}]
  %s5 = inlined_call_operand.hbm [shape: f32[8,32], index: 5, kind: output, shape index: {}]
  %s6 = sld [smem:[#allocation0]]
  $region30: #{kan_linear.1} parent=0
    _
  %s8 = ssub.s32 1, %s6
  %s9 = scalar_select 0, %s8, %s6
  $region1: #{kan_linear.1} parent=0
    #allocation2 [shape = 'u8[4096]{0}', space=vmem, size = 0x1000, scoped, tag = 'output window, operand 0, single buffered']
    #allocation3 [shape = 's32[1]{0}', space=sflag, size = 0x4, scoped, tag = 'scoped memory for kan_linear.1']
    %10 = vsyncpa [#allocation3], 0
    // Predicated region
    $region2: #{kan_linear.1} parent=1 // pred_check
      _
    $region3: #{kan_linear.1} parent=1 // pred_check_branch
      %12 = sbr.rel (0) target = $region5
    $region4: #{kan_linear.1} parent=1 // pred_region
      _
    $region5: #{kan_linear.1} parent=1 // pred_fallthru
      _
    // Predicated region
    $region6: #{kan_linear.1} parent=1 // pred_check
      _
    $region7: #{kan_linear.1} parent=1 // pred_check_branch
      %14 = sbr.rel (0) target = $region9
    $region8: #{kan_linear.1} parent=1 // pred_region
      _
    $region9: #{kan_linear.1} parent=1 // pred_fallthru
      _
    // Predicated region
    $region10: #{kan_linear.1} parent=1 // pred_check
      _
    $region11: #{kan_linear.1} parent=1 // pred_check_branch
      %16 = sbr.rel (0) target = $region13
    $region12: #{kan_linear.1} parent=1 // pred_region
      _
    $region13: #{kan_linear.1} parent=1 // pred_fallthru
      _
    // Predicated region
    $region14: #{kan_linear.1} parent=1 // pred_check
      _
    $region15: #{kan_linear.1} parent=1 // pred_check_branch
      %18 = sbr.rel (0) target = $region17
    $region16: #{kan_linear.1} parent=1 // pred_region
      _
    $region17: #{kan_linear.1} parent=1 // pred_fallthru
      _
    // Predicated region
    $region18: #{kan_linear.1} parent=1 // pred_check
      _
    $region19: #{kan_linear.1} parent=1 // pred_check_branch
      %20 = sbr.rel (0) target = $region21
    $region20: #{kan_linear.1} parent=1 // pred_region
      _
    $region21: #{kan_linear.1} parent=1 // pred_fallthru
      _
    %v21 = vld [vmem:[%s0] sm:$0xff]
    %v22 = vxor.u32 %v21, 2147483648
    %v23 = vmul.f32 %v22, 1.442695
    %v24 = vpow.pop %v23
    %v25 = vadd.f32 %v24, 1.0
    %v26 = vrcp.pop %v25
    %v27 = vmul.f32 1.0, %v26
    %v28 = vmul.f32 %v21, %v27
    %v29 = vld [vmem:[%s3] sm:$0xff]
    %v30 = vld [vmem:[%s3 + $0x8] sm:$0xff]
    %v31 = vld [vmem:[%s2] sm:$0xff]
    %v32 = vld [vmem:[%s2 + $0x8] sm:$0xff]
    %v33 = vld [vmem:[%s2 + $0x10] sm:$0xff]
    %v34 = vld [vmem:[%s2 + $0x18] sm:$0xff]
    %vm35 = vcmask 130048
    %v37 = vsel %vm35, %v21, 0
    %39 = vmatprep.subr.mxu0 0.0
    %40 = vmatpush1.msra.mxu0 0.0
    %41 = vmatprep.subr.mxu0 0.0
    %42 = vmatpush1.msra.mxu0 0.0
    %43 = vmatprep.subr.mxu0 0.0
    %44 = vmatpush1.msra.mxu0 0.0
    %45 = vmatprep.subr.mxu0 0.0
    %46 = vmatpush1.msra.mxu0 0.0
    %47 = vmatprep.subr.mxu0 0.0
    %48 = vmatpush1.msra.mxu0 0.0
    %49 = vmatprep.subr.mxu0 0.0
    %50 = vmatpush1.msra.mxu0 0.0
    %51 = vmatprep.subr.mxu0 0.0
    %52 = vmatpush1.msra.mxu0 0.0
    %53 = vmatprep.subr.mxu0 0.0
    %54 = vmatpush1.msra.mxu0 0.0
    %55 = vmatprep.subr.mxu0 0.0
    %56 = vmatpush1.msra.mxu0 0.0
    %57 = vmatprep.subr.mxu0 0.0
    %58 = vmatpush1.msra.mxu0 0.0
    %59 = vmatprep.subr.mxu0 0.0
    %60 = vmatpush1.msra.mxu0 0.0
    %61 = vmatprep.subr.mxu0 0.0
    %62 = vmatpush1.msra.mxu0 0.0
    %63 = vmatprep.subr.mxu0 0.0
    %64 = vmatpush1.msra.mxu0 0.0
    %65 = vmatprep.subr.mxu0 0.0
    %66 = vmatpush1.msra.mxu0 0.0
    %67 = vmatprep.subr.mxu0 %v34
    %68 = vmatpush1.msra.mxu0 %v33
    %69 = vmatprep.subr.mxu0 %v32
    %70 = vmatpush1.msra.mxu0 %v31
    %71 = vmatprep.subr.mxu0 0.0
    %72 = vmatpush2.msra.mxu0 0.0
    %73 = vmatprep.subr.mxu0 0.0
    %74 = vmatpush2.msra.mxu0 0.0
    %75 = vmatprep.subr.mxu0 0.0
    %76 = vmatpush2.msra.mxu0 0.0
    %77 = vmatprep.subr.mxu0 0.0
    %78 = vmatpush2.msra.mxu0 0.0
    %79 = vmatprep.subr.mxu0 0.0
    %80 = vmatpush2.msra.mxu0 0.0
    %81 = vmatprep.subr.mxu0 0.0
    %82 = vmatpush2.msra.mxu0 0.0
    %83 = vmatprep.subr.mxu0 0.0
    %84 = vmatpush2.msra.mxu0 0.0
    %85 = vmatprep.subr.mxu0 0.0
    %86 = vmatpush2.msra.mxu0 0.0
    %87 = vmatprep.subr.mxu0 0.0
    %88 = vmatpush2.msra.mxu0 0.0
    %89 = vmatprep.subr.mxu0 0.0
    %90 = vmatpush2.msra.mxu0 0.0
    %91 = vmatprep.subr.mxu0 0.0
    %92 = vmatpush2.msra.mxu0 0.0
    %93 = vmatprep.subr.mxu0 0.0
    %94 = vmatpush2.msra.mxu0 0.0
    %95 = vmatprep.subr.mxu0 0.0
    %96 = vmatpush2.msra.mxu0 0.0
    %97 = vmatprep.subr.mxu0 0.0
    %98 = vmatpush2.msra.mxu0 0.0
    %99 = vmatprep.subr.mxu0 0.0
    %100 = vmatpush2.msra.mxu0 0.0
    %101 = vmatprep.subr.mxu0 0.0
    %102 = vmatpush2.msra.mxu0 0.0
    %103 = vmatprep.mubr.f32.mxu0 0.0
    %104 = vmatmul.mubr.f32.gmra.mxu0 %v37
    %v105 = vpop.f32.mrf.mxu0
    %v106 = vadd.f32 0.0, %v105
    %v107 = vpop.f32.mrf.mxu0
    %v108 = vadd.f32 0.0, %v107
    %109 = vdwg.mxu0
    %v110 = vld [vmem:[%s1] sm:$0x1f]
    %v111 = vld [vmem:[%s1 + $0x8] sm:$0x1f]
    %v112 = vlaneseq
    %v113 = vshrl.u32 %v112, 7
    %v114 = vsub.s32 0, %v113
    %v115 = vrot.slane %v110, %v114
    %v116 = vlaneseq
    %v117 = vshrl.u32 %v116, 7
    %v118 = vsub.s32 0, %v117
    %v119 = vrot.slane %v111, %v118
    %v120 = vsub.f32 %v106, %v115
    %v121 = vsub.f32 %v108, %v119
    %vm122 = vcmp.ge.f32.partialorder %v106, %v115
    %vm123 = vcmp.ge.f32.partialorder %v108, %v119
    %v124 = vlaneseq
    %v125 = vshrl.u32 %v124, 7
    %v126 = vsub.s32 1, %v125
    %v127 = vrot.slane %v110, %v126
    %v128 = vlaneseq
    %v129 = vshrl.u32 %v128, 7
    %v130 = vsub.s32 1, %v129
    %v131 = vrot.slane %v111, %v130
    %vm132 = vcmp.lt.f32.partialorder %v106, %v127
    %vm133 = vcmp.lt.f32.partialorder %v108, %v131
    %vm134 = vmand %vm122, %vm132
    %vm135 = vmand %vm123, %vm133
    %v136 = vsel %vm134, 1, 0
    %v137 = vsel %vm135, 1, 0
    %v138 = vcvt.s32.f32 %v136
    %v139 = vcvt.s32.f32 %v137
    %v140 = vlaneseq
    %v141 = vshrl.u32 %v140, 7
    %v142 = vsub.s32 2, %v141
    %v143 = vrot.slane %v110, %v142
    %v144 = vlaneseq
    %v145 = vshrl.u32 %v144, 7
    %v146 = vsub.s32 2, %v145
    %v147 = vrot.slane %v111, %v146
    %v148 = vmul.f32 %v120, %v143
    %v149 = vmul.f32 %v121, %v147
    %v150 = vmul.f32 %v148, %v138
    %v151 = vmul.f32 %v149, %v139
    %v152 = vsub.f32 %v138, %v150
    %v153 = vsub.f32 %v139, %v151
    %154 = vrot.lane.b32.xlu0 %v152, 127
    %v155 = vpop.permute.xlu0 %154
    %156 = vrot.lane.b32.xlu0 %v153, 127
    %v157 = vpop.permute.xlu0 %156
    %v158 = vlaneseq
    %v159 = vand.u32 %v158, 127
    %vm160 = vcmp.lt.s32.totalorder %v159, 127
    %v161 = vsel %vm160, %v155, %v157
    %v162 = vsel %vm160, %v157, %v155
    %v163 = vadd.f32 %v150, %v161
    %v164 = vadd.f32 %v151, %v162
    %v165 = vlaneseq
    %v166 = vshrl.u32 %v165, 7
    %v167 = vsub.s32 3, %v166
    %v168 = vrot.slane %v110, %v167
    %v169 = vlaneseq
    %v170 = vshrl.u32 %v169, 7
    %v171 = vsub.s32 3, %v170
    %v172 = vrot.slane %v111, %v171
    %v173 = vmul.f32 %v120, %v168
    %v174 = vmul.f32 %v121, %v172
    %v175 = vmul.f32 %v173, %v163
    %v176 = vmul.f32 %v174, %v164
    %v177 = vsub.f32 %v163, %v175
    %v178 = vsub.f32 %v164, %v176
    %179 = vrot.lane.b32.xlu0 %v177, 127
    %v180 = vpop.permute.xlu0 %179
    %181 = vrot.lane.b32.xlu0 %v178, 127
    %v182 = vpop.permute.xlu0 %181
    %v183 = vsel %vm160, %v180, %v182
    %v184 = vsel %vm160, %v182, %v180
    %v185 = vadd.f32 %v175, %v183
    %v186 = vadd.f32 %v176, %v184
    %v187 = vlaneseq
    %v188 = vshrl.u32 %v187, 7
    %v189 = vsub.s32 4, %v188
    %v190 = vrot.slane %v110, %v189
    %v191 = vlaneseq
    %v192 = vshrl.u32 %v191, 7
    %v193 = vsub.s32 4, %v192
    %v194 = vrot.slane %v111, %v193
    %v195 = vmul.f32 %v120, %v190
    %v196 = vmul.f32 %v121, %v194
    %v197 = vmul.f32 %v195, %v185
    %v198 = vmul.f32 %v196, %v186
    %v199 = vsub.f32 %v185, %v197
    %v200 = vsub.f32 %v186, %v198
    %201 = vrot.lane.b32.xlu0 %v199, 127
    %v202 = vpop.permute.xlu0 %201
    %203 = vrot.lane.b32.xlu0 %v200, 127
    %v204 = vpop.permute.xlu0 %203
    %v205 = vsel %vm160, %v202, %v204
    %v206 = vsel %vm160, %v204, %v202
    %v207 = vadd.f32 %v197, %v205
    %v208 = vadd.f32 %v198, %v206
    %v209 = vld [vmem:[%s4] sm:$0xff]
    %v210 = vld [vmem:[%s4 + $0x8] sm:$0xff]
    %v211 = vld [vmem:[%s4 + $0x10] sm:$0xff]
    %v212 = vld [vmem:[%s4 + $0x18] sm:$0xff]
    %v213 = vld [vmem:[%s4 + $0x20] sm:$0xff]
    %v214 = vld [vmem:[%s4 + $0x28] sm:$0xff]
    %v215 = vld [vmem:[%s4 + $0x30] sm:$0xff]
    %v216 = vld [vmem:[%s4 + $0x38] sm:$0xff]
    %v217 = vld [vmem:[%s4 + $0x40] sm:$0xff]
    %v218 = vld [vmem:[%s4 + $0x48] sm:$0xff]
    %v219 = vld [vmem:[%s4 + $0x50] sm:$0xff]
    %v220 = vld [vmem:[%s4 + $0x58] sm:$0xff]
    %v221 = vld [vmem:[%s4 + $0x60] sm:$0xff]
    %v222 = vld [vmem:[%s4 + $0x68] sm:$0xff]
    %v223 = vld [vmem:[%s4 + $0x70] sm:$0xff]
    %v224 = vld [vmem:[%s4 + $0x78] sm:$0xff]
    %v225 = vld [vmem:[%s4 + $0x80] sm:$0xff]
    %v226 = vld [vmem:[%s4 + $0x88] sm:$0xff]
    %v227 = vld [vmem:[%s4 + $0x90] sm:$0xff]
    %v228 = vld [vmem:[%s4 + $0x98] sm:$0xff]
    %v229 = vld [vmem:[%s4 + $0xa0] sm:$0xff]
    %v230 = vld [vmem:[%s4 + $0xa8] sm:$0xff]
    %v231 = vld [vmem:[%s4 + $0xb0] sm:$0xff]
    %v232 = vld [vmem:[%s4 + $0xb8] sm:$0xff]
    %v233 = vld [vmem:[%s4 + $0xc0] sm:$0xff]
    %v234 = vld [vmem:[%s4 + $0xc8] sm:$0xff]
    %v235 = vld [vmem:[%s4 + $0xd0] sm:$0xff]
    %v236 = vld [vmem:[%s4 + $0xd8] sm:$0xff]
    %v237 = vld [vmem:[%s4 + $0xe0] sm:$0xff]
    %v238 = vld [vmem:[%s4 + $0xe8] sm:$0xff]
    %v239 = vld [vmem:[%s4 + $0xf0] sm:$0xff]
    %v240 = vld [vmem:[%s4 + $0xf8] sm:$0xff]
    %241 = vmatprep.subr.mxu0 0.0
    %242 = vmatpush1.msra.mxu0 %v224
    %243 = vmatprep.subr.mxu0 0.0
    %244 = vmatpush1.msra.mxu0 %v223
    %245 = vmatprep.subr.mxu0 0.0
    %246 = vmatpush1.msra.mxu0 %v222
    %247 = vmatprep.subr.mxu0 0.0
    %248 = vmatpush1.msra.mxu0 %v221
    %249 = vmatprep.subr.mxu0 0.0
    %250 = vmatpush1.msra.mxu0 %v220
    %251 = vmatprep.subr.mxu0 0.0
    %252 = vmatpush1.msra.mxu0 %v219
    %253 = vmatprep.subr.mxu0 0.0
    %254 = vmatpush1.msra.mxu0 %v218
    %255 = vmatprep.subr.mxu0 0.0
    %256 = vmatpush1.msra.mxu0 %v217
    %257 = vmatprep.subr.mxu0 0.0
    %258 = vmatpush1.msra.mxu0 %v216
    %259 = vmatprep.subr.mxu0 0.0
    %260 = vmatpush1.msra.mxu0 %v215
    %261 = vmatprep.subr.mxu0 0.0
    %262 = vmatpush1.msra.mxu0 %v214
    %263 = vmatprep.subr.mxu0 0.0
    %264 = vmatpush1.msra.mxu0 %v213
    %265 = vmatprep.subr.mxu0 0.0
    %266 = vmatpush1.msra.mxu0 %v212
    %267 = vmatprep.subr.mxu0 0.0
    %268 = vmatpush1.msra.mxu0 %v211
    %269 = vmatprep.subr.mxu0 0.0
    %270 = vmatpush1.msra.mxu0 %v210
    %271 = vmatprep.subr.mxu0 0.0
    %272 = vmatpush1.msra.mxu0 %v209
    %273 = vmatprep.subr.mxu0 0.0
    %274 = vmatpush2.msra.mxu0 %v240
    %275 = vmatprep.subr.mxu0 0.0
    %276 = vmatpush2.msra.mxu0 %v239
    %277 = vmatprep.subr.mxu0 0.0
    %278 = vmatpush2.msra.mxu0 %v238
    %279 = vmatprep.subr.mxu0 0.0
    %280 = vmatpush2.msra.mxu0 %v237
    %281 = vmatprep.subr.mxu0 0.0
    %282 = vmatpush2.msra.mxu0 %v236
    %283 = vmatprep.subr.mxu0 0.0
    %284 = vmatpush2.msra.mxu0 %v235
    %285 = vmatprep.subr.mxu0 0.0
    %286 = vmatpush2.msra.mxu0 %v234
    %287 = vmatprep.subr.mxu0 0.0
    %288 = vmatpush2.msra.mxu0 %v233
    %289 = vmatprep.subr.mxu0 0.0
    %290 = vmatpush2.msra.mxu0 %v232
    %291 = vmatprep.subr.mxu0 0.0
    %292 = vmatpush2.msra.mxu0 %v231
    %293 = vmatprep.subr.mxu0 0.0
    %294 = vmatpush2.msra.mxu0 %v230
    %295 = vmatprep.subr.mxu0 0.0
    %296 = vmatpush2.msra.mxu0 %v229
    %297 = vmatprep.subr.mxu0 0.0
    %298 = vmatpush2.msra.mxu0 %v228
    %299 = vmatprep.subr.mxu0 0.0
    %300 = vmatpush2.msra.mxu0 %v227
    %301 = vmatprep.subr.mxu0 0.0
    %302 = vmatpush2.msra.mxu0 %v226
    %303 = vmatprep.subr.mxu0 0.0
    %304 = vmatpush2.msra.mxu0 %v225
    %305 = vmatprep.mubr.f32.mxu0 %v208
    %306 = vmatmul.mubr.f32.gmra.mxu0 %v207
    %v307 = vpop.f32.mrf.mxu0
    %v308 = vadd.f32 0.0, %v307
    %v309 = vpop.f32.mrf.mxu0
    %310 = vdwg.mxu0
    %v312 = vsel %vm35, %v28, 0
    %314 = vmatprep.subr.mxu0 0.0
    %315 = vmatpush1.msra.mxu0 0.0
    %316 = vmatprep.subr.mxu0 0.0
    %317 = vmatpush1.msra.mxu0 0.0
    %318 = vmatprep.subr.mxu0 0.0
    %319 = vmatpush1.msra.mxu0 0.0
    %320 = vmatprep.subr.mxu0 0.0
    %321 = vmatpush1.msra.mxu0 0.0
    %322 = vmatprep.subr.mxu0 0.0
    %323 = vmatpush1.msra.mxu0 0.0
    %324 = vmatprep.subr.mxu0 0.0
    %325 = vmatpush1.msra.mxu0 0.0
    %326 = vmatprep.subr.mxu0 0.0
    %327 = vmatpush1.msra.mxu0 0.0
    %328 = vmatprep.subr.mxu0 0.0
    %329 = vmatpush1.msra.mxu0 0.0
    %330 = vmatprep.subr.mxu0 0.0
    %331 = vmatpush1.msra.mxu0 0.0
    %332 = vmatprep.subr.mxu0 0.0
    %333 = vmatpush1.msra.mxu0 0.0
    %334 = vmatprep.subr.mxu0 0.0
    %335 = vmatpush1.msra.mxu0 0.0
    %336 = vmatprep.subr.mxu0 0.0
    %337 = vmatpush1.msra.mxu0 0.0
    %338 = vmatprep.subr.mxu0 0.0
    %339 = vmatpush1.msra.mxu0 0.0
    %340 = vmatprep.subr.mxu0 0.0
    %341 = vmatpush1.msra.mxu0 0.0
    %342 = vmatprep.subr.mxu0 0.0
    %343 = vmatpush1.msra.mxu0 %v30
    %344 = vmatprep.subr.mxu0 0.0
    %345 = vmatpush1.msra.mxu0 %v29
    %346 = vmatprep.subr.mxu0 0.0
    %347 = vmatpush2.msra.mxu0 0.0
    %348 = vmatprep.subr.mxu0 0.0
    %349 = vmatpush2.msra.mxu0 0.0
    %350 = vmatprep.subr.mxu0 0.0
    %351 = vmatpush2.msra.mxu0 0.0
    %352 = vmatprep.subr.mxu0 0.0
    %353 = vmatpush2.msra.mxu0 0.0
    %354 = vmatprep.subr.mxu0 0.0
    %355 = vmatpush2.msra.mxu0 0.0
    %356 = vmatprep.subr.mxu0 0.0
    %357 = vmatpush2.msra.mxu0 0.0
    %358 = vmatprep.subr.mxu0 0.0
    %359 = vmatpush2.msra.mxu0 0.0
    %360 = vmatprep.subr.mxu0 0.0
    %361 = vmatpush2.msra.mxu0 0.0
    %362 = vmatprep.subr.mxu0 0.0
    %363 = vmatpush2.msra.mxu0 0.0
    %364 = vmatprep.subr.mxu0 0.0
    %365 = vmatpush2.msra.mxu0 0.0
    %366 = vmatprep.subr.mxu0 0.0
    %367 = vmatpush2.msra.mxu0 0.0
    %368 = vmatprep.subr.mxu0 0.0
    %369 = vmatpush2.msra.mxu0 0.0
    %370 = vmatprep.subr.mxu0 0.0
    %371 = vmatpush2.msra.mxu0 0.0
    %372 = vmatprep.subr.mxu0 0.0
    %373 = vmatpush2.msra.mxu0 0.0
    %374 = vmatprep.subr.mxu0 0.0
    %375 = vmatpush2.msra.mxu0 0.0
    %376 = vmatprep.subr.mxu0 0.0
    %377 = vmatpush2.msra.mxu0 0.0
    %378 = vmatprep.mubr.f32.mxu0 0.0
    %379 = vmatmul.mubr.f32.gmra.mxu0 %v312
    %v380 = vpop.f32.mrf.mxu0
    %v381 = vadd.f32 %v308, %v380
    %v382 = vpop.f32.mrf.mxu0
    %383 = vdwg.mxu0
    %vm384 = vcmask 261120
    %385 = vst.msk [vmem:[#allocation2] sm:$0xff] %vm384, %v381
    // Predicated region
    $region22: #{kan_linear.1} parent=1 // pred_check
      _
    $region23: #{kan_linear.1} parent=1 // pred_check_branch
      %387 = sbr.rel (0) target = $region25
    $region24: #{kan_linear.1} parent=1 // pred_region
      %s389 = ssub.s32 128, 128
      %390 = vsyncadd [#allocation3], %s389
      %s392 = sshll.u32 [#allocation2], 4
      %s393 = int_to_ptr.vmem [resolvable:$true] %s392
      %395 = dma.vmem_to_hbm [thread:$0]  %s393, 128, %s5, [#allocation3]
    $region25: #{kan_linear.1} parent=1 // pred_fallthru
      _
    // Predicated region
    $region26: #{kan_linear.1} parent=1 // pred_check
      _
    $region27: #{kan_linear.1} parent=1 // pred_check_branch
      %397 = sbr.rel (0) target = $region29
    $region28: #{kan_linear.1} parent=1 // pred_region
      %398 = dma.done [#allocation3], 128
    $region29: #{kan_linear.1} parent=1 // pred_fallthru
      _
    %399 = vsyncpa [#allocation3], 1

</llo_original>
